<compile_context>
chip_gen: v7x
topology: tpu7x:2x2x1
jax: 0.10.0
libtpu: 0.0.40
codegen_flags: <defaults>
</compile_context>

<pallas_src>
import functools
import math

import jax
import jax.numpy as jnp
from jax import lax
from jax.experimental import pallas as pl
from jax.experimental.pallas import tpu as pltpu


# --------------------------------------------------------------------------- #
# Relative-position "left shift" of one (tq, k_len) score block
# --------------------------------------------------------------------------- #
def _rel_shift(bd, row0, q_len, k_len, use_roll):
    """out[i, j] = bd_orig[i, j + (q_len-1) - (row0+i)] if < k_len else 0.

    use_roll=True : `bd` was computed against a +1-column pre-rolled r; one
        strided pltpu.roll (per-row amount row0+i+m_len in [m_len, k_len-1],
        never wrapping) plus one iota select implements the whole shift.
    use_roll=False: log2(q_len)-stage barrel-shifter fallback (static zero-fill
        left shifts, selected per row by an iota bit test) on the raw bd.
    """
    tq = bd.shape[0]
    m_len = k_len - q_len
    rowc = lax.broadcasted_iota(jnp.int32, (tq, 1), 0)        # local row index

    if use_roll:
        x = pltpu.roll(bd, row0 + m_len, axis=1, stride=1, stride_axis=0)
    else:
        amount = (q_len - 1) - (row0 + rowc)                  # (tq, 1), >= 0
        x = bd
        s = 1
        while s < q_len:                                      # static unroll
            shifted = jnp.concatenate(
                [x[:, s:], jnp.zeros((tq, s), x.dtype)], axis=-1)
            x = jnp.where((amount & s) != 0, shifted, x)
            s *= 2

    col = lax.broadcasted_iota(jnp.int32, (tq, k_len), 1)
    valid = col <= (m_len + row0 + rowc)                      # zero wrapped tail
    return jnp.where(valid, x, 0.0)


@functools.lru_cache(maxsize=None)
def _roll_rel_shift_ok(q_len, k_len, tq):
    """Verify the pltpu.roll-based rel-shift (rotate direction, stride
    semantics, shape support) at the exact block geometry used by the main
    kernel.  Returns False (-> barrel-shifter fallback) if anything is off."""
    n_q_tiles = q_len // tq
    try:
        bd = jnp.arange(1, q_len * k_len + 1,
                        dtype=jnp.float32).reshape(q_len, k_len)
        bd_pre = jnp.roll(bd, 1, axis=1)          # same pre-roll as the wrapper

        def kern(x_ref, o_ref):
            row0 = pl.program_id(0) * tq if n_q_tiles > 1 else 0
            o_ref[...] = _rel_shift(x_ref[...], row0, q_len, k_len, True)

        got = pl.pallas_call(
            kern,
            out_shape=jax.ShapeDtypeStruct((q_len, k_len), jnp.float32),
            grid_spec=pltpu.PrefetchScalarGridSpec(
                num_scalar_prefetch=0,
                grid=(n_q_tiles,),
                in_specs=[pl.BlockSpec((tq, k_len), lambda i: (i, 0))],
                out_specs=pl.BlockSpec((tq, k_len), lambda i: (i, 0)),
            ),
        )(bd_pre)
        got = jax.device_get(got)

        i = jnp.arange(q_len)[:, None]
        j = jnp.arange(k_len)[None, :]
        src = j + (q_len - 1) - i
        want = jnp.where(
            src < k_len,
            jnp.take_along_axis(bd, jnp.clip(src, 0, k_len - 1), axis=1),
            0.0)
        return bool(jnp.allclose(got, want, atol=1e-5, rtol=1e-5))
    except Exception:                      # unsupported lowering -> safe path
        return False


# ----------------------------- Pallas kernel ------------------------------- #
def _make_kernel(q_len, k_len, tq, n_q_tiles, d_head, use_roll):
    inv_sqrt_d = 1.0 / math.sqrt(d_head)

    def kernel(q_ref, k_ref, v_ref, r_ref, u_ref, vb_ref, o_ref):
        # Blocks: q (1,1,tq,d)  k/v (1,1,k_len,d)  r (1,k_len,d)  u/vb (1,1,d)
        row0 = pl.program_id(2) * tq if n_q_tiles > 1 else 0

        q = q_ref[0, 0]                       # (tq, d)
        kk = k_ref[0, 0]                      # (k_len, d)
        vv = v_ref[0, 0]                      # (k_len, d)
        rr = r_ref[0]                         # (k_len, d)   (pre-rolled iff roll path)
        u = u_ref[0]                          # (1, d)
        vb = vb_ref[0]                        # (1, d)

        # Fold 1/sqrt(d_head) into the MXU operands.
        qu = (q + u) * inv_sqrt_d
        qv = (q + vb) * inv_sqrt_d
        # TODO(synk): cast qu/qv, kk, rr (and probs below) to bfloat16 for full
        # MXU rate on v6e/v7x once the accuracy budget allows (breaks the 1e-4
        # f32 reference check used here).

        # Contractions over d_head (no explicit transpose), f32 accumulation.
        ac = jnp.einsum('qd,kd->qk', qu, kk,
                        preferred_element_type=jnp.float32)
        bd = jnp.einsum('qd,kd->qk', qv, rr,
                        preferred_element_type=jnp.float32)

        w = ac + _rel_shift(bd, row0, q_len, k_len, use_roll)

        # NOTE: the reference's `weight.masked_fill(mask == False, 1e-12)` is
        # not in-place and its result is discarded, so the mask has no effect;
        # reproduced faithfully by not applying it.

        # Softmax in f32 (v5e has no bf16 VPU/EUP).
        w = w - jnp.max(w, axis=-1, keepdims=True)
        e = jnp.exp(w)
        l = jnp.sum(e, axis=-1, keepdims=True)
        inv = pl.reciprocal(l, approx=True)        # EUP slot
        inv = inv * (2.0 - l * inv)                # one Newton step -> ~f32 exact
        probs = (e * inv).astype(vv.dtype)

        # Single PV matmul per step (heads live on the grid, so no per-head
        # Python loop / concat and no extra vreg pressure).
        out = jnp.dot(probs, vv, preferred_element_type=jnp.float32)
        o_ref[0, 0] = out.astype(o_ref.dtype)

    return kernel


# ------------------------------- wrapper ----------------------------------- #
def _choose_q_tile(q_len, k_len):
    """Largest MXU/lane-aligned q tile that keeps ~4 live f32 copies of the
    (tq, k_len) score block within ~8 MiB (comfortable on every generation,
    including v7x's 64 MiB physical VMEM)."""
    budget = 8 * 2 ** 20
    max_tq = max(8, budget // (16 * max(k_len, 1)))   # 4 copies * 4 B
    if q_len <= max_tq:
        return q_len
    for cand in (512, 256, 128, 64, 32, 16, 8):
        if cand <= max_tq and q_len % cand == 0:
            return cand
    return q_len   # no aligned divisor -> single (possibly large) q block


def scaled_dot_product_attention(q, k, v, r, uT, vT, mask=None, p=None):
    """Pallas-TPU implementation of ScaledDotProductAttention.forward."""
    del mask   # masked_fill in the reference is not in-place and its result is
               # discarded, so the mask is a no-op; reproduced faithfully.
    del p      # TODO(synk): dropout not implemented; module default p=None.

    bs, head, q_len, d_head = q.shape
    k_len = k.shape[2]

    tq = _choose_q_tile(q_len, k_len)
    n_q_tiles = q_len // tq

    use_roll = _roll_rel_shift_ok(q_len, k_len, tq)
    # +1 cyclic column pre-roll folded into r keeps every per-row rotate amount
    # strictly below k_len; only needed on the roll path.
    r_in = jnp.roll(r, 1, axis=1) if use_roll else r

    # Scoped-VMEM request sized to the per-step footprint (double-buffered
    # blocks + live f32 score copies), with headroom; capped well under v7x's
    # 64 MiB physical VMEM.
    itemsize = jnp.dtype(q.dtype).itemsize
    blk_in = (tq * d_head + 3 * k_len * d_head + 2 * d_head) * itemsize
    blk_out = tq * d_head * itemsize
    est = 2 * (blk_in + blk_out) + 4 * tq * k_len * 4
    vmem_limit = int(min(max(2 * est, 32 * 2 ** 20), 56 * 2 ** 20))

    kernel = _make_kernel(q_len, k_len, tq, n_q_tiles, d_head, use_roll)

    return pl.pallas_call(
        kernel,
        out_shape=jax.ShapeDtypeStruct((bs, head, q_len, d_head), q.dtype),
        grid_spec=pltpu.PrefetchScalarGridSpec(
            num_scalar_prefetch=0,
            grid=(bs, head, n_q_tiles),
            in_specs=[
                pl.BlockSpec((1, 1, tq, d_head), lambda b, h, i: (b, h, i, 0)),    # q
                pl.BlockSpec((1, 1, k_len, d_head), lambda b, h, i: (b, h, 0, 0)), # k
                pl.BlockSpec((1, 1, k_len, d_head), lambda b, h, i: (b, h, 0, 0)), # v
                pl.BlockSpec((1, k_len, d_head), lambda b, h, i: (h, 0, 0)),       # _r
                pl.BlockSpec((1, 1, d_head), lambda b, h, i: (h, 0, 0)),           # uT
                pl.BlockSpec((1, 1, d_head), lambda b, h, i: (h, 0, 0)),           # vT
            ],
            out_specs=pl.BlockSpec((1, 1, tq, d_head),
                                   lambda b, h, i: (b, h, i, 0)),
        ),
        compiler_params=pltpu.CompilerParams(
            dimension_semantics=("parallel", "parallel", "parallel"),
            vmem_limit_bytes=vmem_limit),
    )(q, k, v, r_in, uT, vT)


# ---------------------- pure-JAX reference (for check) --------------------- #
def _left_shift_ref(x):
    bs, head, q_len, k_len = x.shape
    m_len = k_len - q_len
    row_pad = jnp.zeros((bs, head, q_len, 1), x.dtype)
    col_pad = jnp.zeros((bs, head, m_len, k_len + 1), x.dtype)
    x = jnp.concatenate([row_pad, x], axis=-1)
    x = jnp.concatenate([x, col_pad], axis=-2)
    x = x.reshape(bs, head, -1, k_len)
    x1 = jnp.tril(x[:, :, 1:q_len + 1, :q_len], k=1)
    x2 = x[:, :, :q_len, q_len:k_len]
    return jnp.concatenate([x2, x1], axis=-1)


def _ref_forward(q, k, v, r, uT, vT, mask):
    d_head = q.shape[-1]
    AC = (q + uT) @ jnp.swapaxes(k, -1, -2)
    BD = (q + vT) @ jnp.swapaxes(r, -1, -2)
    BD = _left_shift_ref(BD)
    w = (AC + BD) / math.sqrt(d_head)
    # masked_fill in the reference is a no-op (result discarded) -> skip mask
    w = jax.nn.softmax(w, axis=-1)
    return w @ v


# --------------------------------- main ------------------------------------ #
if __name__ == "__main__":
    key = jax.random.PRNGKey(0)
    bs, head, q_len, m_len, d_head = 2, 4, 8, 8, 32
    k_len = m_len + q_len

    ks = jax.random.split(key, 7)
    q = jax.random.normal(ks[0], (bs, head, q_len, d_head), jnp.float32)
    k = jax.random.normal(ks[1], (bs, head, k_len, d_head), jnp.float32)
    v = jax.random.normal(ks[2], (bs, head, k_len, d_head), jnp.float32)
    r = jax.random.normal(ks[3], (head, m_len + q_len, d_head), jnp.float32)
    uT = jax.random.normal(ks[4], (head, 1, d_head), jnp.float32)
    vT = jax.random.normal(ks[5], (head, 1, d_head), jnp.float32)
    mask = jax.random.bernoulli(ks[6], 0.5, (bs, 1, q_len, k_len))

    out = scaled_dot_product_attention(q, k, v, r, uT, vT, mask)
    out = jax.block_until_ready(out)

    ref = _ref_forward(q, k, v, r, uT, vT, mask)
    assert out.shape == (bs, head, q_len, d_head)
    assert jnp.allclose(out, ref, atol=1e-4, rtol=1e-4), "mismatch vs reference"

    print("KERNEL_OK")
</pallas_src>

<mosaic_0001>
module attributes {stable_mosaic.version = 11 : i64} {
  func.func @kern(%arg0: i32, %arg1: memref<8x16xf32, #tpu.memory_space<vmem>>, %arg2: memref<8x16xf32, #tpu.memory_space<vmem>>) attributes {dimension_semantics = [#tpu.dimension_semantics<arbitrary>], iteration_bounds = array<i64: 1>, scalar_prefetch = 0 : i64, scratch_operands = 0 : i64, tpu.core_type = #tpu.core_type<tc>, window_params = [{transform_indices = @transform_0, window_bounds = array<i64: 8, 16>}, {transform_indices = @transform_1, window_bounds = array<i64: 8, 16>}]} {
    %c0 = arith.constant 0 : index
    %c0_0 = arith.constant 0 : index
    %0 = vector.load %arg1[%c0, %c0_0] : memref<8x16xf32, #tpu.memory_space<vmem>>, vector<8x16xf32>
    %1 = tpu.iota {dimensions = array<i32: 0>} : vector<8x1xi32>
    %c8_i32 = arith.constant 8 : i32
    %2 = tpu.dynamic_rotate %0 by %c8_i32 dim 1 {stride = 1 : si32, stride_dimension = 0 : si32} : vector<8x16xf32>, i32 -> vector<8x16xf32>
    %3 = tpu.iota {dimensions = array<i32: 1>} : vector<8x16xi32>
    %c8_i32_1 = arith.constant 8 : i32
    %4 = vector.broadcast %c8_i32_1 : i32 to vector<8x1xi32>
    %5 = arith.addi %4, %1 : vector<8x1xi32>
    %6 = vector.broadcast %5 : vector<8x1xi32> to vector<8x16xi32>
    %7 = arith.cmpi sle, %3, %6 : vector<8x16xi32>
    %cst = arith.constant 0.000000e+00 : f32
    %8 = vector.broadcast %cst : f32 to vector<8x16xf32>
    %9 = arith.select %7, %2, %8 : vector<8x16xi1>, vector<8x16xf32>
    %c0_2 = arith.constant 0 : index
    %c0_3 = arith.constant 0 : index
    %10 = vector.load %arg2[%c0_2, %c0_3] : memref<8x16xf32, #tpu.memory_space<vmem>>, vector<8x16xf32>
    tpu.vector_store %arg2[%c0_2, %c0_3], %9 {strides = array<i32>} : memref<8x16xf32, #tpu.memory_space<vmem>>, vector<8x16xf32>,
    return
  }
  func.func @transform_0(%arg0: i32) -> (i32, i32) {
    %c0_i32 = arith.constant 0 : i32
    %c0_i32_0 = arith.constant 0 : i32
    return %arg0, %c0_i32 : i32, i32
  }
  func.func @transform_1(%arg0: i32) -> (i32, i32) {
    %c0_i32 = arith.constant 0 : i32
    %c0_i32_0 = arith.constant 0 : i32
    return %arg0, %c0_i32 : i32, i32
  }
}

module attributes {stable_mosaic.version = 11 : i64} {
  func.func @kernel(%arg0: i32, %arg1: i32, %arg2: i32, %arg3: memref<1x1x8x32xf32, #tpu.memory_space<vmem>>, %arg4: memref<1x1x16x32xf32, #tpu.memory_space<vmem>>, %arg5: memref<1x1x16x32xf32, #tpu.memory_space<vmem>>, %arg6: memref<1x16x32xf32, #tpu.memory_space<vmem>>, %arg7: memref<1x1x32xf32, #tpu.memory_space<vmem>>, %arg8: memref<1x1x32xf32, #tpu.memory_space<vmem>>, %arg9: memref<1x1x8x32xf32, #tpu.memory_space<vmem>>) attributes {dimension_semantics = [#tpu.dimension_semantics<parallel>, #tpu.dimension_semantics<parallel>, #tpu.dimension_semantics<parallel>], iteration_bounds = array<i64: 2, 4, 1>, scalar_prefetch = 0 : i64, scratch_operands = 0 : i64, tpu.core_type = #tpu.core_type<tc>, window_params = [{transform_indices = @transform_0, window_bounds = array<i64: 1, 1, 8, 32>}, {transform_indices = @transform_1, window_bounds = array<i64: 1, 1, 16, 32>}, {transform_indices = @transform_2, window_bounds = array<i64: 1, 1, 16, 32>}, {transform_indices = @transform_3, window_bounds = array<i64: 1, 16, 32>}, {transform_indices = @transform_4, window_bounds = array<i64: 1, 1, 32>}, {transform_indices = @transform_5, window_bounds = array<i64: 1, 1, 32>}, {transform_indices = @transform_6, window_bounds = array<i64: 1, 1, 8, 32>}]} {
    %c0 = arith.constant 0 : index
    %c0_0 = arith.constant 0 : index
    %c0_1 = arith.constant 0 : index
    %c0_2 = arith.constant 0 : index
    %0 = vector.load %arg3[%c0, %c0_0, %c0_1, %c0_2] : memref<1x1x8x32xf32, #tpu.memory_space<vmem>>, vector<1x1x8x32xf32>
    %1 = vector.shape_cast %0 : vector<1x1x8x32xf32> to vector<8x32xf32>
    %c0_3 = arith.constant 0 : index
    %c0_4 = arith.constant 0 : index
    %c0_5 = arith.constant 0 : index
    %c0_6 = arith.constant 0 : index
    %2 = vector.load %arg4[%c0_3, %c0_4, %c0_5, %c0_6] : memref<1x1x16x32xf32, #tpu.memory_space<vmem>>, vector<1x1x16x32xf32>
    %3 = vector.shape_cast %2 : vector<1x1x16x32xf32> to vector<16x32xf32>
    %c0_7 = arith.constant 0 : index
    %c0_8 = arith.constant 0 : index
    %c0_9 = arith.constant 0 : index
    %c0_10 = arith.constant 0 : index
    %4 = vector.load %arg5[%c0_7, %c0_8, %c0_9, %c0_10] : memref<1x1x16x32xf32, #tpu.memory_space<vmem>>, vector<1x1x16x32xf32>
    %5 = vector.shape_cast %4 : vector<1x1x16x32xf32> to vector<16x32xf32>
    %c0_11 = arith.constant 0 : index
    %c0_12 = arith.constant 0 : index
    %c0_13 = arith.constant 0 : index
    %6 = vector.load %arg6[%c0_11, %c0_12, %c0_13] : memref<1x16x32xf32, #tpu.memory_space<vmem>>, vector<1x16x32xf32>
    %7 = vector.shape_cast %6 : vector<1x16x32xf32> to vector<16x32xf32>
    %c0_14 = arith.constant 0 : index
    %c0_15 = arith.constant 0 : index
    %c0_16 = arith.constant 0 : index
    %8 = vector.load %arg7[%c0_14, %c0_15, %c0_16] : memref<1x1x32xf32, #tpu.memory_space<vmem>>, vector<1x1x32xf32>
    %9 = vector.shape_cast %8 : vector<1x1x32xf32> to vector<1x32xf32>
    %c0_17 = arith.constant 0 : index
    %c0_18 = arith.constant 0 : index
    %c0_19 = arith.constant 0 : index
    %10 = vector.load %arg8[%c0_17, %c0_18, %c0_19] : memref<1x1x32xf32, #tpu.memory_space<vmem>>, vector<1x1x32xf32>
    %11 = vector.shape_cast %10 : vector<1x1x32xf32> to vector<1x32xf32>
    %12 = vector.broadcast %9 : vector<1x32xf32> to vector<8x32xf32>
    %13 = arith.addf %1, %12 : vector<8x32xf32>
    %cst = arith.constant 0.176776692 : f32
    %14 = vector.broadcast %cst : f32 to vector<8x32xf32>
    %15 = arith.mulf %13, %14 : vector<8x32xf32>
    %16 = vector.broadcast %11 : vector<1x32xf32> to vector<8x32xf32>
    %17 = arith.addf %1, %16 : vector<8x32xf32>
    %cst_20 = arith.constant 0.176776692 : f32
    %18 = vector.broadcast %cst_20 : f32 to vector<8x32xf32>
    %19 = arith.mulf %17, %18 : vector<8x32xf32>
    "tpu.trace_start"() <{level = 10 : i32, message = "qd,kd->qk"}> : () -> ()
    %cst_21 = arith.constant dense<0.000000e+00> : vector<8x16xf32>
    %20 = tpu.matmul %15, %3, %cst_21 {dimension_numbers = #tpu.dot_dimension_numbers<[1], [1], [0], [0], [0, 0, 1, 0], [], []>} : vector<8x32xf32>, vector<16x32xf32>, vector<8x16xf32> -> vector<8x16xf32>
    %cst_22 = arith.constant dense<0.000000e+00> : vector<8x16xf32>
    %21 = tpu.matmul %19, %7, %cst_22 {dimension_numbers = #tpu.dot_dimension_numbers<[1], [1], [0], [0], [0, 0, 1, 0], [], []>} : vector<8x32xf32>, vector<16x32xf32>, vector<8x16xf32> -> vector<8x16xf32>
    "tpu.trace_stop"() : () -> ()
    %22 = tpu.iota {dimensions = array<i32: 0>} : vector<8x1xi32>
    %c0_i32 = arith.constant 0 : i32
    %23 = vector.broadcast %c0_i32 : i32 to vector<8x1xi32>
    %24 = arith.addi %23, %22 : vector<8x1xi32>
    %c7_i32 = arith.constant 7 : i32
    %25 = vector.broadcast %c7_i32 : i32 to vector<8x1xi32>
    %26 = arith.subi %25, %24 : vector<8x1xi32>
    %27 = vector.extract_strided_slice %21 {offsets = [0, 1], sizes = [8, 15], strides = [1, 1]} : vector<8x16xf32> to vector<8x15xf32>
    %cst_23 = arith.constant 0.000000e+00 : f32
    %28 = vector.broadcast %cst_23 : f32 to vector<8x1xf32>
    %29 = tpu.concatenate %27, %28 in 1 : vector<8x15xf32>, vector<8x1xf32> -> vector<8x16xf32>
    %c1_i32 = arith.constant 1 : i32
    %30 = vector.broadcast %c1_i32 : i32 to vector<8x1xi32>
    %31 = arith.andi %26, %30 : vector<8x1xi32>
    %c0_i32_24 = arith.constant 0 : i32
    %32 = vector.broadcast %c0_i32_24 : i32 to vector<8x1xi32>
    %33 = arith.cmpi ne, %31, %32 : vector<8x1xi32>
    %34 = vector.shape_cast %33 : vector<8x1xi1> to vector<8x1xi1>
    %35 = vector.broadcast %34 : vector<8x1xi1> to vector<8x16xi1>
    %36 = arith.select %35, %29, %21 : vector<8x16xi1>, vector<8x16xf32>
    %37 = vector.extract_strided_slice %36 {offsets = [0, 2], sizes = [8, 14], strides = [1, 1]} : vector<8x16xf32> to vector<8x14xf32>
    %cst_25 = arith.constant 0.000000e+00 : f32
    %38 = vector.broadcast %cst_25 : f32 to vector<8x2xf32>
    %39 = tpu.concatenate %37, %38 in 1 : vector<8x14xf32>, vector<8x2xf32> -> vector<8x16xf32>
    %c2_i32 = arith.constant 2 : i32
    %40 = vector.broadcast %c2_i32 : i32 to vector<8x1xi32>
    %41 = arith.andi %26, %40 : vector<8x1xi32>
    %c0_i32_26 = arith.constant 0 : i32
    %42 = vector.broadcast %c0_i32_26 : i32 to vector<8x1xi32>
    %43 = arith.cmpi ne, %41, %42 : vector<8x1xi32>
    %44 = vector.shape_cast %43 : vector<8x1xi1> to vector<8x1xi1>
    %45 = vector.broadcast %44 : vector<8x1xi1> to vector<8x16xi1>
    %46 = arith.select %45, %39, %36 : vector<8x16xi1>, vector<8x16xf32>
    %47 = vector.extract_strided_slice %46 {offsets = [0, 4], sizes = [8, 12], strides = [1, 1]} : vector<8x16xf32> to vector<8x12xf32>
    %cst_27 = arith.constant 0.000000e+00 : f32
    %48 = vector.broadcast %cst_27 : f32 to vector<8x4xf32>
    %49 = tpu.concatenate %47, %48 in 1 : vector<8x12xf32>, vector<8x4xf32> -> vector<8x16xf32>
    %c4_i32 = arith.constant 4 : i32
    %50 = vector.broadcast %c4_i32 : i32 to vector<8x1xi32>
    %51 = arith.andi %26, %50 : vector<8x1xi32>
    %c0_i32_28 = arith.constant 0 : i32
    %52 = vector.broadcast %c0_i32_28 : i32 to vector<8x1xi32>
    %53 = arith.cmpi ne, %51, %52 : vector<8x1xi32>
    %54 = vector.shape_cast %53 : vector<8x1xi1> to vector<8x1xi1>
    %55 = vector.broadcast %54 : vector<8x1xi1> to vector<8x16xi1>
    %56 = arith.select %55, %49, %46 : vector<8x16xi1>, vector<8x16xf32>
    %57 = tpu.iota {dimensions = array<i32: 1>} : vector<8x16xi32>
    %c8_i32 = arith.constant 8 : i32
    %58 = vector.broadcast %c8_i32 : i32 to vector<8x1xi32>
    %59 = arith.addi %58, %22 : vector<8x1xi32>
    %60 = vector.broadcast %59 : vector<8x1xi32> to vector<8x16xi32>
    %61 = arith.cmpi sle, %57, %60 : vector<8x16xi32>
    %cst_29 = arith.constant 0.000000e+00 : f32
    %62 = vector.broadcast %cst_29 : f32 to vector<8x16xf32>
    %63 = arith.select %61, %56, %62 : vector<8x16xi1>, vector<8x16xf32>
    %64 = arith.addf %20, %63 : vector<8x16xf32>
    %cst_30 = arith.constant dense<0xFF800000> : vector<8xf32>
    %65 = vector.multi_reduction <maximumf>, %64, %cst_30 [1] : vector<8x16xf32> to vector<8xf32>
    %66 = vector.shape_cast %65 : vector<8xf32> to vector<8x1xf32>
    %67 = vector.broadcast %66 : vector<8x1xf32> to vector<8x16xf32>
    %68 = arith.subf %64, %67 : vector<8x16xf32>
    %69 = math.exp %68 : vector<8x16xf32>
    %cst_31 = arith.constant dense<0.000000e+00> : vector<8xf32>
    %70 = vector.multi_reduction <add>, %69, %cst_31 [1] : vector<8x16xf32> to vector<8xf32>
    %71 = vector.shape_cast %70 : vector<8xf32> to vector<8x1xf32>
    %72 = tpu.reciprocal %71 {approx = true} : vector<8x1xf32> -> vector<8x1xf32>
    %73 = arith.mulf %71, %72 : vector<8x1xf32>
    %cst_32 = arith.constant 2.000000e+00 : f32
    %74 = vector.broadcast %cst_32 : f32 to vector<8x1xf32>
    %75 = arith.subf %74, %73 : vector<8x1xf32>
    %76 = arith.mulf %72, %75 : vector<8x1xf32>
    %77 = vector.broadcast %76 : vector<8x1xf32> to vector<8x16xf32>
    %78 = arith.mulf %69, %77 : vector<8x16xf32>
    %cst_33 = arith.constant dense<0.000000e+00> : vector<8x32xf32>
    %79 = tpu.matmul %78, %5, %cst_33 {dimension_numbers = #tpu.dot_dimension_numbers<[1], [0], [0], [1], [0, 0, 1, 1], [], []>} : vector<8x16xf32>, vector<16x32xf32>, vector<8x32xf32> -> vector<8x32xf32>
    %c0_34 = arith.constant 0 : index
    %c0_35 = arith.constant 0 : index
    %c0_36 = arith.constant 0 : index
    %c0_37 = arith.constant 0 : index
    %80 = vector.load %arg9[%c0_34, %c0_35, %c0_36, %c0_37] : memref<1x1x8x32xf32, #tpu.memory_space<vmem>>, vector<1x1x8x32xf32>
    %81 = vector.shape_cast %80 : vector<1x1x8x32xf32> to vector<8x32xf32>
    %82 = vector.shape_cast %79 : vector<8x32xf32> to vector<1x1x8x32xf32>
    tpu.vector_store %arg9[%c0_34, %c0_35, %c0_36, %c0_37], %82 {strides = array<i32>} : memref<1x1x8x32xf32, #tpu.memory_space<vmem>>, vector<1x1x8x32xf32>,
    return
  }
  func.func @transform_0(%arg0: i32, %arg1: i32, %arg2: i32) -> (i32, i32, i32, i32) {
    %c0_i32 = arith.constant 0 : i32
    %c0_i32_0 = arith.constant 0 : i32
    return %arg0, %arg1, %arg2, %c0_i32 : i32, i32, i32, i32
  }
  func.func @transform_1(%arg0: i32, %arg1: i32, %arg2: i32) -> (i32, i32, i32, i32) {
    %c0_i32 = arith.constant 0 : i32
    %c0_i32_0 = arith.constant 0 : i32
    %c0_i32_1 = arith.constant 0 : i32
    return %arg0, %arg1, %c0_i32, %c0_i32_0 : i32, i32, i32, i32
  }
  func.func @transform_2(%arg0: i32, %arg1: i32, %arg2: i32) -> (i32, i32, i32, i32) {
    %c0_i32 = arith.constant 0 : i32
    %c0_i32_0 = arith.constant 0 : i32
    %c0_i32_1 = arith.constant 0 : i32
    return %arg0, %arg1, %c0_i32, %c0_i32_0 : i32, i32, i32, i32
  }
  func.func @transform_3(%arg0: i32, %arg1: i32, %arg2: i32) -> (i32, i32, i32) {
    %c0_i32 = arith.constant 0 : i32
    %c0_i32_0 = arith.constant 0 : i32
    %c0_i32_1 = arith.constant 0 : i32
    return %arg1, %c0_i32, %c0_i32_0 : i32, i32, i32
  }
  func.func @transform_4(%arg0: i32, %arg1: i32, %arg2: i32) -> (i32, i32, i32) {
    %c0_i32 = arith.constant 0 : i32
    %c0_i32_0 = arith.constant 0 : i32
    %c0_i32_1 = arith.constant 0 : i32
    return %arg1, %c0_i32, %c0_i32_0 : i32, i32, i32
  }
  func.func @transform_5(%arg0: i32, %arg1: i32, %arg2: i32) -> (i32, i32, i32) {
    %c0_i32 = arith.constant 0 : i32
    %c0_i32_0 = arith.constant 0 : i32
    %c0_i32_1 = arith.constant 0 : i32
    return %arg1, %c0_i32, %c0_i32_0 : i32, i32, i32
  }
  func.func @transform_6(%arg0: i32, %arg1: i32, %arg2: i32) -> (i32, i32, i32, i32) {
    %c0_i32 = arith.constant 0 : i32
    %c0_i32_0 = arith.constant 0 : i32
    return %arg0, %arg1, %arg2, %c0_i32 : i32, i32, i32, i32
  }
}

</mosaic_0001>

<llo_original>
// kernel: tpu_custom_call.1
$region0: #{tpu_custom_call.1}
  #allocation0 [shape = 'u32[]', space=smem, size = 0x4, offset = 0x4, fixed_abs, tag = 'smem constant byte address 0x4 - core index']
  #allocation1 [shape = 'u32[144,128]{1,0:T(1,128)}', space=vmem, size = 0x12000, scoped, tag = 'internal scratch']
  %s0 = inlined_call_operand.hbm [shape: f32[2,4,8,32], index: 0, kind: input, shape index: {}]
  %s1 = inlined_call_operand.hbm [shape: f32[2,4,16,32], index: 1, kind: input, shape index: {}]
  %s2 = inlined_call_operand.hbm [shape: f32[2,4,16,32], index: 2, kind: input, shape index: {}]
  %s3 = inlined_call_operand.hbm [shape: f32[4,16,32], index: 3, kind: input, shape index: {}]
  %s4 = inlined_call_operand.vmem [shape: f32[4,1,32], index: 4, kind: input, shape index: {}]
  %s5 = inlined_call_operand.vmem [shape: f32[4,1,32], index: 5, kind: input, shape index: {}]
  %s6 = inlined_call_operand.hbm [shape: f32[2,4,8,32], index: 6, kind: output, shape index: {}]
  %s7 = sld [smem:[#allocation0]]
  $region73: #{tpu_custom_call.1} parent=0
    _
  %s9 = ssub.s32 1, %s7
  %s10 = scalar_select 0, %s9, %s7
  $region1: #{tpu_custom_call.1} parent=0
    #allocation2 [shape = 'u8[8192]{0}', space=vmem, size = 0x2000, scoped, tag = 'input window, operand 0']
    #allocation3 [shape = 's32[2]{0}', space=sflag, size = 0x8, scoped, tag = 'scoped memory for tpu_custom_call.1']
    #allocation4 [shape = 's32[2]{0}', space=sflag, size = 0x8, scoped, tag = 'scoped memory for tpu_custom_call.1']
    #allocation5 [shape = 'u8[16384]{0}', space=vmem, size = 0x4000, scoped, tag = 'input window, operand 1']
    #allocation6 [shape = 's32[2]{0}', space=sflag, size = 0x8, scoped, tag = 'scoped memory for tpu_custom_call.1']
    #allocation7 [shape = 'u8[16384]{0}', space=vmem, size = 0x4000, scoped, tag = 'input window, operand 2']
    #allocation8 [shape = 'u8[16384]{0}', space=vmem, size = 0x4000, scoped, tag = 'input window, operand 3']
    #allocation9 [shape = 's32[2]{0}', space=sflag, size = 0x8, scoped, tag = 'scoped memory for tpu_custom_call.1']
    #allocation10 [shape = 'u8[8192]{0}', space=vmem, size = 0x2000, scoped, tag = 'output window, operand 0']
    %11 = vsyncpa [#allocation3], 0
    %s12 = scalar_lea.sflag [#allocation3], 1
    %13 = vsyncpa %s12, 0
    %14 = vsyncpa [#allocation6], 0
    %s15 = scalar_lea.sflag [#allocation6], 1
    %16 = vsyncpa %s15, 0
    %17 = vsyncpa [#allocation9], 0
    %s18 = scalar_lea.sflag [#allocation9], 1
    %19 = vsyncpa %s18, 0
    %20 = vsyncpa [#allocation4], 0
    %s21 = scalar_lea.sflag [#allocation4], 1
    %22 = vsyncpa %s21, 0
    loop: start=0, step=1, limit=10
    $region2: #{tpu_custom_call.1} parent=1 // loop_pre_header
      _
    $region3: #{tpu_custom_call.1} parent=1 // loop_header
      %s24 = sphi 0, %s28
      %p25 = scmp.ge.s32.totalorder %s24, 10
      %s31 = sphi 0, %s50
      %s32 = sphi 0, %s46
      %s33 = sphi 0, %s42
      %s34 = sphi 0, %s31
      %s35 = sphi 0, %s32
      %s36 = sphi 0, %s33
      %s37 = sphi 0, %s34
      %s38 = sphi 0, %s35
      %s39 = sphi 0, %s36
      %s57 = sphi 0, %s59
      %s60 = sphi 0, %s57
      %s61 = sphi 0, %s60
      %s77 = sphi 0, %s61
      %s85 = sphi 0, %s87
      %s88 = sphi 0, %s85
      %s89 = sphi 0, %s88
      %s105 = sphi 0, %s89
      %s113 = sphi 0, %s115
      %s116 = sphi 0, %s113
      %s117 = sphi 0, %s116
      %s133 = sphi 0, %s117
      %s139 = sphi 0, %s141
      %s142 = sphi 0, %s139
      %s143 = sphi 0, %s142
      %s159 = sphi 0, %s143
      %s165 = sphi 0, %s167
      %s168 = sphi 0, %s165
      %s169 = sphi 0, %s168
      %s185 = sphi 0, %s169
      %s191 = sphi 0, %s193
      %s194 = sphi 0, %s191
      %s195 = sphi 0, %s194
      %s211 = sphi 0, %s195
      %s221 = sphi 0, %s223
      %s224 = sphi 0, %s221
      %s225 = sphi 0, %s224
      %s241 = sphi 0, %s225
    $region4: #{tpu_custom_call.1} parent=1 // loop_header_branch
      %27 = sbr.rel (%p25) target = $region8
    $region5: #{tpu_custom_call.1} parent=1 // loop_body
      %s29 = ssub.s32 %s24, 1
      %s30 = ssub.s32 %s24, 2
      %s40 = sadd.s32 1, %s33
      %p41 = scmp.ge.s32.totalorder %s40, 1
      %s42 = scalar_select %p41, 0, %s40
      %s43 = sadd.s32 1, %s32
      %s44 = scalar_select %p41, %s43, %s32
      %p45 = scmp.ge.s32.totalorder %s44, 4
      %s46 = scalar_select %p45, 0, %s44
      %s47 = sadd.s32 1, %s31
      %s48 = scalar_select %p45, %s47, %s31
      %p49 = scmp.ge.s32.totalorder %s48, 2
      %s50 = scalar_select %p49, 0, %s48
      %s51 = ssub.s32 %s31, %s50
      %s52 = ssub.s32 %s32, %s46
      %s53 = sor.u32 %s51, %s52
      %s54 = ssub.s32 %s33, %s42
      %s55 = sor.u32 %s53, %s54
      %p56 = scmp.eq.s32.totalorder %s55, 0
      %s58 = sadd.s32 %s57, 1
      %s59 = scalar_select %p56, %s57, %s58
      %p62 = pneg %p56
      %p63 = scmp.eq.s32.totalorder %s24, 7
      %p64 = por %p62, %p63
      %p65 = scmp.ne.s32.totalorder %s57, %s60
      %p66 = scmp.eq.s32.totalorder %s24, 0
      %p67 = por %p65, %p66
      %p68 = scmp.ne.s32.totalorder %s57, %s60
      %p69 = scmp.eq.s32.totalorder %s29, 7
      %p70 = por %p68, %p69
      %p71 = scmp.ne.s32.totalorder %s60, %s61
      %p72 = scmp.eq.s32.totalorder %s29, 0
      %p73 = por %p71, %p72
      %p74 = scmp.ne.s32.totalorder %s60, %s61
      %p75 = scmp.eq.s32.totalorder %s30, 7
      %p76 = por %p74, %p75
      %p78 = scmp.ne.s32.totalorder %s61, %s77
      %p79 = scmp.eq.s32.totalorder %s30, 0
      %p80 = por %p78, %p79
      %s81 = ssub.s32 %s31, %s50
      %s82 = ssub.s32 %s32, %s46
      %s83 = sor.u32 %s81, %s82
      %p84 = scmp.eq.s32.totalorder %s83, 0
      %s86 = sadd.s32 %s85, 1
      %s87 = scalar_select %p84, %s85, %s86
      %p90 = pneg %p84
      %p91 = scmp.eq.s32.totalorder %s24, 7
      %p92 = por %p90, %p91
      %p93 = scmp.ne.s32.totalorder %s85, %s88
      %p94 = scmp.eq.s32.totalorder %s24, 0
      %p95 = por %p93, %p94
      %p96 = scmp.ne.s32.totalorder %s85, %s88
      %p97 = scmp.eq.s32.totalorder %s29, 7
      %p98 = por %p96, %p97
      %p99 = scmp.ne.s32.totalorder %s88, %s89
      %p100 = scmp.eq.s32.totalorder %s29, 0
      %p101 = por %p99, %p100
      %p102 = scmp.ne.s32.totalorder %s88, %s89
      %p103 = scmp.eq.s32.totalorder %s30, 7
      %p104 = por %p102, %p103
      %p106 = scmp.ne.s32.totalorder %s89, %s105
      %p107 = scmp.eq.s32.totalorder %s30, 0
      %p108 = por %p106, %p107
      %s109 = ssub.s32 %s31, %s50
      %s110 = ssub.s32 %s32, %s46
      %s111 = sor.u32 %s109, %s110
      %p112 = scmp.eq.s32.totalorder %s111, 0
      %s114 = sadd.s32 %s113, 1
      %s115 = scalar_select %p112, %s113, %s114
      %p118 = pneg %p112
      %p119 = scmp.eq.s32.totalorder %s24, 7
      %p120 = por %p118, %p119
      %p121 = scmp.ne.s32.totalorder %s113, %s116
      %p122 = scmp.eq.s32.totalorder %s24, 0
      %p123 = por %p121, %p122
      %p124 = scmp.ne.s32.totalorder %s113, %s116
      %p125 = scmp.eq.s32.totalorder %s29, 7
      %p126 = por %p124, %p125
      %p127 = scmp.ne.s32.totalorder %s116, %s117
      %p128 = scmp.eq.s32.totalorder %s29, 0
      %p129 = por %p127, %p128
      %p130 = scmp.ne.s32.totalorder %s116, %s117
      %p131 = scmp.eq.s32.totalorder %s30, 7
      %p132 = por %p130, %p131
      %p134 = scmp.ne.s32.totalorder %s117, %s133
      %p135 = scmp.eq.s32.totalorder %s30, 0
      %p136 = por %p134, %p135
      %s137 = ssub.s32 %s32, %s46
      %p138 = scmp.eq.s32.totalorder %s137, 0
      %s140 = sadd.s32 %s139, 1
      %s141 = scalar_select %p138, %s139, %s140
      %p144 = pneg %p138
      %p145 = scmp.eq.s32.totalorder %s24, 7
      %p146 = por %p144, %p145
      %p147 = scmp.ne.s32.totalorder %s139, %s142
      %p148 = scmp.eq.s32.totalorder %s24, 0
      %p149 = por %p147, %p148
      %p150 = scmp.ne.s32.totalorder %s139, %s142
      %p151 = scmp.eq.s32.totalorder %s29, 7
      %p152 = por %p150, %p151
      %p153 = scmp.ne.s32.totalorder %s142, %s143
      %p154 = scmp.eq.s32.totalorder %s29, 0
      %p155 = por %p153, %p154
      %p156 = scmp.ne.s32.totalorder %s142, %s143
      %p157 = scmp.eq.s32.totalorder %s30, 7
      %p158 = por %p156, %p157
      %p160 = scmp.ne.s32.totalorder %s143, %s159
      %p161 = scmp.eq.s32.totalorder %s30, 0
      %p162 = por %p160, %p161
      %s163 = ssub.s32 %s32, %s46
      %p164 = scmp.eq.s32.totalorder %s163, 0
      %s166 = sadd.s32 %s165, 1
      %s167 = scalar_select %p164, %s165, %s166
      %p170 = pneg %p164
      %p171 = scmp.eq.s32.totalorder %s24, 7
      %p172 = por %p170, %p171
      %p173 = scmp.ne.s32.totalorder %s165, %s168
      %p174 = scmp.eq.s32.totalorder %s24, 0
      %p175 = por %p173, %p174
      %p176 = scmp.ne.s32.totalorder %s165, %s168
      %p177 = scmp.eq.s32.totalorder %s29, 7
      %p178 = por %p176, %p177
      %p179 = scmp.ne.s32.totalorder %s168, %s169
      %p180 = scmp.eq.s32.totalorder %s29, 0
      %p181 = por %p179, %p180
      %p182 = scmp.ne.s32.totalorder %s168, %s169
      %p183 = scmp.eq.s32.totalorder %s30, 7
      %p184 = por %p182, %p183
      %p186 = scmp.ne.s32.totalorder %s169, %s185
      %p187 = scmp.eq.s32.totalorder %s30, 0
      %p188 = por %p186, %p187
      %s189 = ssub.s32 %s32, %s46
      %p190 = scmp.eq.s32.totalorder %s189, 0
      %s192 = sadd.s32 %s191, 1
      %s193 = scalar_select %p190, %s191, %s192
      %p196 = pneg %p190
      %p197 = scmp.eq.s32.totalorder %s24, 7
      %p198 = por %p196, %p197
      %p199 = scmp.ne.s32.totalorder %s191, %s194
      %p200 = scmp.eq.s32.totalorder %s24, 0
      %p201 = por %p199, %p200
      %p202 = scmp.ne.s32.totalorder %s191, %s194
      %p203 = scmp.eq.s32.totalorder %s29, 7
      %p204 = por %p202, %p203
      %p205 = scmp.ne.s32.totalorder %s194, %s195
      %p206 = scmp.eq.s32.totalorder %s29, 0
      %p207 = por %p205, %p206
      %p208 = scmp.ne.s32.totalorder %s194, %s195
      %p209 = scmp.eq.s32.totalorder %s30, 7
      %p210 = por %p208, %p209
      %p212 = scmp.ne.s32.totalorder %s195, %s211
      %p213 = scmp.eq.s32.totalorder %s30, 0
      %p214 = por %p212, %p213
      %s215 = ssub.s32 %s31, %s50
      %s216 = ssub.s32 %s32, %s46
      %s217 = sor.u32 %s215, %s216
      %s218 = ssub.s32 %s33, %s42
      %s219 = sor.u32 %s217, %s218
      %p220 = scmp.eq.s32.totalorder %s219, 0
      %s222 = sadd.s32 %s221, 1
      %s223 = scalar_select %p220, %s221, %s222
      %p226 = pneg %p220
      %p227 = scmp.eq.s32.totalorder %s24, 7
      %p228 = por %p226, %p227
      %p229 = scmp.ne.s32.totalorder %s221, %s224
      %p230 = scmp.eq.s32.totalorder %s24, 0
      %p231 = por %p229, %p230
      %p232 = scmp.ne.s32.totalorder %s221, %s224
      %p233 = scmp.eq.s32.totalorder %s29, 7
      %p234 = por %p232, %p233
      %p235 = scmp.ne.s32.totalorder %s224, %s225
      %p236 = scmp.eq.s32.totalorder %s29, 0
      %p237 = por %p235, %p236
      %p238 = scmp.ne.s32.totalorder %s224, %s225
      %p239 = scmp.eq.s32.totalorder %s30, 7
      %p240 = por %p238, %p239
      %p242 = scmp.ne.s32.totalorder %s225, %s241
      %p243 = scmp.eq.s32.totalorder %s30, 0
      %p244 = por %p242, %p243
      %p245 = scmp.le.s32.totalorder 1, %s24
      %p246 = scmp.lt.s32.totalorder %s24, 9
      %p247 = pnand %p245, %p246
      %p248 = pneg %p247
      // Predicated region
      $region9: #{tpu_custom_call.1} parent=5 // pred_check
        _
      $region10: #{tpu_custom_call.1} parent=5 // pred_check_branch
        %250 = sbr.rel (%p247) target = $region12
      $region11: #{tpu_custom_call.1} parent=5 // pred_region
        %s251 = ssub.s32 %s24, 1
      $region12: #{tpu_custom_call.1} parent=5 // pred_fallthru
        _
      %p252 = scmp.lt.s32.totalorder %s24, 8
      // Predicated region
      $region13: #{tpu_custom_call.1} parent=5 // pred_check
        %p253 = pneg %p252
      $region14: #{tpu_custom_call.1} parent=5 // pred_check_branch
        %255 = sbr.rel (%p253) target = $region16
      $region15: #{tpu_custom_call.1} parent=5 // pred_region
        // Predicated region
        $region17: #{tpu_custom_call.1} parent=15 // pred_check
          %p256 = pneg %p67
        $region18: #{tpu_custom_call.1} parent=15 // pred_check_branch
          %258 = sbr.rel (%p256) target = $region20
        $region19: #{tpu_custom_call.1} parent=15 // pred_region
          %s259 = sand.u32 %s57, 1
          %s260 = scalar_lea.sflag [#allocation3], %s259
          %s261 = sand.u32 %s57, 1
          %s262 = smul.addr %s261, 8
          %s263 = scalar_lea.vmem [#allocation2], %s262
          %s265 = ssub.s32 128, 128
          %266 = vsyncadd %s260, %s265
          %s267 = sadd.s32 %s33, %s32
          %s268 = smul.addr %s31, 4
          %s269 = sadd.s32 %s267, %s268
          %s270 = smul.addr %s269, 128
          %s271 = scalar_lea.hbm %s0, %s270
          %s273 = sshll.u32 %s263, 4
          %s274 = int_to_ptr.vmem [resolvable:$true] %s273
          %276 = dma.hbm_to_vmem [thread:$0]  %s271, 128, %s274, %s260
        $region20: #{tpu_custom_call.1} parent=15 // pred_fallthru
          _
        // Predicated region
        $region21: #{tpu_custom_call.1} parent=15 // pred_check
          %p277 = pneg %p95
        $region22: #{tpu_custom_call.1} parent=15 // pred_check_branch
          %279 = sbr.rel (%p277) target = $region24
        $region23: #{tpu_custom_call.1} parent=15 // pred_region
          %s280 = sand.u32 %s24, 1
          %s281 = scalar_lea.sflag [#allocation6], %s280
          %s282 = sand.u32 %s85, 1
          %s283 = smul.addr %s282, 16
          %s284 = scalar_lea.vmem [#allocation5], %s283
          %s286 = ssub.s32 256, 256
          %287 = vsyncadd %s281, %s286
          %s288 = smul.addr %s32, 2
          %s289 = smul.addr %s31, 8
          %s290 = sadd.s32 %s288, %s289
          %s291 = smul.addr %s290, 128
          %s292 = scalar_lea.hbm %s1, %s291
          %s293 = sshll.u32 %s284, 4
          %s294 = int_to_ptr.vmem [resolvable:$true] %s293
          %299 = dma.hbm_to_vmem [thread:$0]  %s292, 256, %s294, %s281, 128, 128, 8
        $region24: #{tpu_custom_call.1} parent=15 // pred_fallthru
          _
        // Predicated region
        $region25: #{tpu_custom_call.1} parent=15 // pred_check
          %p300 = pneg %p123
        $region26: #{tpu_custom_call.1} parent=15 // pred_check_branch
          %302 = sbr.rel (%p300) target = $region28
        $region27: #{tpu_custom_call.1} parent=15 // pred_region
          %s303 = sand.u32 %s24, 1
          %s304 = scalar_lea.sflag [#allocation6], %s303
          %s305 = sand.u32 %s113, 1
          %s306 = smul.addr %s305, 16
          %s307 = scalar_lea.vmem [#allocation7], %s306
          %s309 = ssub.s32 256, 256
          %310 = vsyncadd %s304, %s309
          %s311 = smul.addr %s32, 2
          %s312 = smul.addr %s31, 8
          %s313 = sadd.s32 %s311, %s312
          %s314 = smul.addr %s313, 128
          %s315 = scalar_lea.hbm %s2, %s314
          %s316 = sshll.u32 %s307, 4
          %s317 = int_to_ptr.vmem [resolvable:$true] %s316
          %322 = dma.hbm_to_vmem [thread:$0]  %s315, 256, %s317, %s304, 128, 128, 8
        $region28: #{tpu_custom_call.1} parent=15 // pred_fallthru
          _
        // Predicated region
        $region29: #{tpu_custom_call.1} parent=15 // pred_check
          %p323 = pneg %p149
        $region30: #{tpu_custom_call.1} parent=15 // pred_check_branch
          %325 = sbr.rel (%p323) target = $region32
        $region31: #{tpu_custom_call.1} parent=15 // pred_region
          %s326 = sand.u32 %s139, 1
          %s327 = scalar_lea.sflag [#allocation9], %s326
          %s328 = sand.u32 %s139, 1
          %s329 = smul.addr %s328, 16
          %s330 = scalar_lea.vmem [#allocation8], %s329
          %s332 = ssub.s32 256, 256
          %333 = vsyncadd %s327, %s332
          %s334 = smul.addr %s32, 2
          %s335 = smul.addr %s334, 128
          %s336 = scalar_lea.hbm %s3, %s335
          %s337 = sshll.u32 %s330, 4
          %s338 = int_to_ptr.vmem [resolvable:$true] %s337
          %343 = dma.hbm_to_vmem [thread:$0]  %s336, 256, %s338, %s327, 128, 128, 8
        $region32: #{tpu_custom_call.1} parent=15 // pred_fallthru
          _
        // Predicated region
        $region33: #{tpu_custom_call.1} parent=15 // pred_check
          %p344 = pneg %p175
        $region34: #{tpu_custom_call.1} parent=15 // pred_check_branch
          %346 = sbr.rel (%p344) target = $region36
        $region35: #{tpu_custom_call.1} parent=15 // pred_region
          %p347 = scmp.lt.s32.totalorder %s32, 3
          %s348 = scalar_select %p347, %s32, 3
          %s349 = scalar_lea.vmem %s4, %s348
        $region36: #{tpu_custom_call.1} parent=15 // pred_fallthru
          _
        // Predicated region
        $region37: #{tpu_custom_call.1} parent=15 // pred_check
          %p350 = pneg %p201
        $region38: #{tpu_custom_call.1} parent=15 // pred_check_branch
          %352 = sbr.rel (%p350) target = $region40
        $region39: #{tpu_custom_call.1} parent=15 // pred_region
          %p353 = scmp.lt.s32.totalorder %s32, 3
          %s354 = scalar_select %p353, %s32, 3
          %s355 = scalar_lea.vmem %s5, %s354
        $region40: #{tpu_custom_call.1} parent=15 // pred_fallthru
          _
      $region16: #{tpu_custom_call.1} parent=5 // pred_fallthru
        _
      %p356 = scmp.le.s32.totalorder 1, %s24
      %p357 = scmp.lt.s32.totalorder %s24, 9
      %p358 = pnand %p356, %p357
      %p359 = pneg %p358
      // Predicated region
      $region41: #{tpu_custom_call.1} parent=5 // pred_check
        _
      $region42: #{tpu_custom_call.1} parent=5 // pred_check_branch
        %361 = sbr.rel (%p358) target = $region44
      $region43: #{tpu_custom_call.1} parent=5 // pred_region
        %s362 = ssub.s32 %s24, 1
        %s363 = sand.u32 %s60, 1
        %s364 = scalar_lea.sflag [#allocation3], %s363
        %s365 = sand.u32 %s60, 1
        %s366 = smul.addr %s365, 8
        %s367 = scalar_lea.vmem [#allocation2], %s366
        // Predicated region
        $region45: #{tpu_custom_call.1} parent=43 // pred_check
          %p368 = pneg %p73
        $region46: #{tpu_custom_call.1} parent=43 // pred_check_branch
          %370 = sbr.rel (%p368) target = $region48
        $region47: #{tpu_custom_call.1} parent=43 // pred_region
          %371 = dma.done %s364, 128
        $region48: #{tpu_custom_call.1} parent=43 // pred_fallthru
          _
        %s372 = sand.u32 %s29, 1
        %s373 = scalar_lea.sflag [#allocation6], %s372
        %s374 = sand.u32 %s88, 1
        %s375 = smul.addr %s374, 16
        %s376 = scalar_lea.vmem [#allocation5], %s375
        // Predicated region
        $region49: #{tpu_custom_call.1} parent=43 // pred_check
          %p377 = pneg %p101
        $region50: #{tpu_custom_call.1} parent=43 // pred_check_branch
          %379 = sbr.rel (%p377) target = $region52
        $region51: #{tpu_custom_call.1} parent=43 // pred_region
          %380 = dma.done %s373, 256
        $region52: #{tpu_custom_call.1} parent=43 // pred_fallthru
          _
        %s381 = sand.u32 %s29, 1
        %s382 = scalar_lea.sflag [#allocation6], %s381
        %s383 = sand.u32 %s116, 1
        %s384 = smul.addr %s383, 16
        %s385 = scalar_lea.vmem [#allocation7], %s384
        // Predicated region
        $region53: #{tpu_custom_call.1} parent=43 // pred_check
          %p386 = pneg %p129
        $region54: #{tpu_custom_call.1} parent=43 // pred_check_branch
          %388 = sbr.rel (%p386) target = $region56
        $region55: #{tpu_custom_call.1} parent=43 // pred_region
          %389 = dma.done %s382, 256
        $region56: #{tpu_custom_call.1} parent=43 // pred_fallthru
          _
        %s390 = sand.u32 %s142, 1
        %s391 = scalar_lea.sflag [#allocation9], %s390
        %s392 = sand.u32 %s142, 1
        %s393 = smul.addr %s392, 16
        %s394 = scalar_lea.vmem [#allocation8], %s393
        // Predicated region
        $region57: #{tpu_custom_call.1} parent=43 // pred_check
          %p395 = pneg %p155
        $region58: #{tpu_custom_call.1} parent=43 // pred_check_branch
          %397 = sbr.rel (%p395) target = $region60
        $region59: #{tpu_custom_call.1} parent=43 // pred_region
          %398 = dma.done %s391, 256
        $region60: #{tpu_custom_call.1} parent=43 // pred_fallthru
          _
        %s399 = sand.u32 %s60, 1
        %s400 = scalar_lea.sflag [#allocation3], %s399
        %s401 = sand.u32 %s60, 1
        %s402 = smul.addr %s401, 8
        %s403 = scalar_lea.vmem [#allocation2], %s402
        %p404 = pneg %p73
        %p405 = pneg %p70
        %s406 = sand.u32 %s29, 1
        %s407 = scalar_lea.sflag [#allocation6], %s406
        %s408 = sand.u32 %s88, 1
        %s409 = smul.addr %s408, 16
        %s410 = scalar_lea.vmem [#allocation5], %s409
        %p411 = pneg %p101
        %p412 = pneg %p98
        %s413 = sand.u32 %s29, 1
        %s414 = scalar_lea.sflag [#allocation6], %s413
        %s415 = sand.u32 %s116, 1
        %s416 = smul.addr %s415, 16
        %s417 = scalar_lea.vmem [#allocation7], %s416
        %p418 = pneg %p129
        %p419 = pneg %p126
        %s420 = sand.u32 %s142, 1
        %s421 = scalar_lea.sflag [#allocation9], %s420
        %s422 = sand.u32 %s142, 1
        %s423 = smul.addr %s422, 16
        %s424 = scalar_lea.vmem [#allocation8], %s423
        %p425 = pneg %p155
        %p426 = pneg %p152
        %p427 = scmp.lt.s32.totalorder %s35, 3
        %s428 = scalar_select %p427, %s35, 3
        %s429 = scalar_lea.vmem %s4, %s428
        %p430 = pneg %p181
        %p431 = pneg %p178
        %p432 = scmp.lt.s32.totalorder %s35, 3
        %s433 = scalar_select %p432, %s35, 3
        %s434 = scalar_lea.vmem %s5, %s433
        %p435 = pneg %p207
        %p436 = pneg %p204
        %p437 = pneg %p237
        %p438 = pneg %p234
        %s439 = sand.u32 %s224, 1
        %s440 = scalar_lea.sflag [#allocation4], %s439
        %s441 = sand.u32 %s224, 1
        %s442 = smul.addr %s441, 8
        %s443 = scalar_lea.vmem [#allocation10], %s442
        %p444 = scmp.lt.s32.totalorder %s35, 3
        %s445 = scalar_select %p444, %s35, 3
        %s446 = scalar_lea.vmem %s4, %s445
        %p447 = scmp.lt.s32.totalorder %s35, 3
        %s448 = scalar_select %p447, %s35, 3
        %s449 = scalar_lea.vmem %s5, %s448
        %v450 = vld [vmem:[%s367] sm:$0xff]
        %v451 = vld [vmem:[%s376] sm:$0xff]
        %v452 = vld [vmem:[%s376 + $0x8] sm:$0xff]
        %v453 = vld [vmem:[%s385] sm:$0xff]
        %v454 = vld [vmem:[%s385 + $0x8] sm:$0xff]
        %v455 = vld [vmem:[%s394] sm:$0xff]
        %v456 = vld [vmem:[%s394 + $0x8] sm:$0xff]
        %v457 = vld [vmem:[%s446] sm:$0x1]
        %v458 = vld [vmem:[%s449] sm:$0x1]
        %v460 = vlaneseq
        %v461 = vshrl.u32 %v460, 7
        %v462 = vsub.s32 0, %v461
        %v463 = vrot.slane %v457, %v462
        %v465 = vadd.f32 %v450, %v463
        %v466 = vmul.f32 %v465, 0.17677669
        %v468 = vlaneseq
        %v469 = vshrl.u32 %v468, 7
        %v470 = vsub.s32 0, %v469
        %v471 = vrot.slane %v458, %v470
        %v473 = vadd.f32 %v450, %v471
        %v474 = vmul.f32 %v473, 0.17677669
        %vm475 = vcmask 261120
        %v477 = vsel %vm475, %v474, 0
        %v480 = vsel %vm475, %v455, 0
        %v483 = vsel %vm475, %v456, 0
        %485 = vmatprep.subr.mxu0 0.0
        %486 = vmatpush1.xpose.msra.mxu0 %v480
        %487 = vmatprep.subr.mxu0 0.0
        %488 = vmatpush1.xpose.msra.mxu0 %v483
        %489 = vmatprep.subr.mxu0 0.0
        %490 = vmatpush1.xpose.msra.mxu0 0.0
        %491 = vmatprep.subr.mxu0 0.0
        %492 = vmatpush1.xpose.msra.mxu0 0.0
        %493 = vmatprep.subr.mxu0 0.0
        %494 = vmatpush1.xpose.msra.mxu0 0.0
        %495 = vmatprep.subr.mxu0 0.0
        %496 = vmatpush1.xpose.msra.mxu0 0.0
        %497 = vmatprep.subr.mxu0 0.0
        %498 = vmatpush1.xpose.msra.mxu0 0.0
        %499 = vmatprep.subr.mxu0 0.0
        %500 = vmatpush1.xpose.msra.mxu0 0.0
        %501 = vmatprep.subr.mxu0 0.0
        %502 = vmatpush1.xpose.msra.mxu0 0.0
        %503 = vmatprep.subr.mxu0 0.0
        %504 = vmatpush1.xpose.msra.mxu0 0.0
        %505 = vmatprep.subr.mxu0 0.0
        %506 = vmatpush1.xpose.msra.mxu0 0.0
        %507 = vmatprep.subr.mxu0 0.0
        %508 = vmatpush1.xpose.msra.mxu0 0.0
        %509 = vmatprep.subr.mxu0 0.0
        %510 = vmatpush1.xpose.msra.mxu0 0.0
        %511 = vmatprep.subr.mxu0 0.0
        %512 = vmatpush1.xpose.msra.mxu0 0.0
        %513 = vmatprep.subr.mxu0 0.0
        %514 = vmatpush1.xpose.msra.mxu0 0.0
        %515 = vmatprep.subr.mxu0 0.0
        %516 = vmatpush1.xpose.msra.mxu0 0.0
        %517 = vmatprep.subr.mxu0 0.0
        %518 = vmatpush1.xpose.msra.mxu0 0.0
        %519 = vmatprep.subr.mxu0 0.0
        %520 = vmatpush1.xpose.msra.mxu0 0.0
        %521 = vmatprep.subr.mxu0 0.0
        %522 = vmatpush1.xpose.msra.mxu0 0.0
        %523 = vmatprep.subr.mxu0 0.0
        %524 = vmatpush1.xpose.msra.mxu0 0.0
        %525 = vmatprep.subr.mxu0 0.0
        %526 = vmatpush1.xpose.msra.mxu0 0.0
        %527 = vmatprep.subr.mxu0 0.0
        %528 = vmatpush1.xpose.msra.mxu0 0.0
        %529 = vmatprep.subr.mxu0 0.0
        %530 = vmatpush1.xpose.msra.mxu0 0.0
        %531 = vmatprep.subr.mxu0 0.0
        %532 = vmatpush1.xpose.msra.mxu0 0.0
        %533 = vmatprep.subr.mxu0 0.0
        %534 = vmatpush1.xpose.msra.mxu0 0.0
        %535 = vmatprep.subr.mxu0 0.0
        %536 = vmatpush1.xpose.msra.mxu0 0.0
        %537 = vmatprep.subr.mxu0 0.0
        %538 = vmatpush1.xpose.msra.mxu0 0.0
        %539 = vmatprep.subr.mxu0 0.0
        %540 = vmatpush1.xpose.msra.mxu0 0.0
        %541 = vmatprep.subr.mxu0 0.0
        %542 = vmatpush1.xpose.msra.mxu0 0.0
        %543 = vmatprep.subr.mxu0 0.0
        %544 = vmatpush1.xpose.msra.mxu0 0.0
        %545 = vmatprep.subr.mxu0 0.0
        %546 = vmatpush1.xpose.msra.mxu0 0.0
        %547 = vmatprep.subr.mxu0 0.0
        %548 = vmatpush1.xpose.msra.mxu0 0.0
        %549 = vmatprep.mubr.f32.mxu0 0.0
        %550 = vmatmul.mubr.f32.gmra.mrb[0].mxu0 %v477
        %v551 = vpop.f32.mrb[0].mxu0
        %v552 = vadd.f32 0.0, %v551
        %v553 = vpop.f32.mrb[0].mxu0
        %554 = vdwg.mxu0
        %v555 = vlaneseq
        %v556 = vshrl.u32 %v555, 7
        %v557 = vsub.s32 7, %v556
        %559 = vrot.lane.b32.xlu0 %v552, 127
        %v560 = vpop.permute.xlu0 %559
        %vm562 = vcmask 121856
        %v563 = vsel %vm562, %v560, 0.0
        %v564 = vand.u32 %v557, 1
        %vm565 = vcmp.ne.s32.totalorder %v564, 0
        %v566 = vsel %vm565, 1, 0
        %vm567 = vcmp.eq.s32.totalorder %v566, 1
        %v568 = vsel %vm567, %v563, %v552
        %570 = vrot.lane.b32.xlu0 %v568, 126
        %v571 = vpop.permute.xlu0 %570
        %vm573 = vcmask 113664
        %v574 = vsel %vm573, %v571, 0.0
        %v575 = vand.u32 %v557, 2
        %vm576 = vcmp.ne.s32.totalorder %v575, 0
        %v577 = vsel %vm576, 1, 0
        %vm578 = vcmp.eq.s32.totalorder %v577, 1
        %v579 = vsel %vm578, %v574, %v568
        %581 = vrot.lane.b32.xlu0 %v579, 124
        %v582 = vpop.permute.xlu0 %581
        %vm584 = vcmask 97280
        %v585 = vsel %vm584, %v582, 0.0
        %v586 = vand.u32 %v557, 4
        %vm587 = vcmp.ne.s32.totalorder %v586, 0
        %v588 = vsel %vm587, 1, 0
        %vm589 = vcmp.eq.s32.totalorder %v588, 1
        %v590 = vsel %vm589, %v585, %v579
        %v591 = vlaneseq
        %v592 = vand.u32 %v591, 127
        %v593 = vadd.s32 %v556, 8
        %vm594 = vcmp.le.s32.totalorder %v592, %v593
        %v595 = vsel %vm594, %v590, 0.0
        %v597 = vsel %vm475, %v466, 0
        %v600 = vsel %vm475, %v451, 0
        %v603 = vsel %vm475, %v452, 0
        %605 = vmatprep.subr.mxu0 0.0
        %606 = vmatpush1.xpose.msra.mxu0 %v600
        %607 = vmatprep.subr.mxu0 0.0
        %608 = vmatpush1.xpose.msra.mxu0 %v603
        %609 = vmatprep.subr.mxu0 0.0
        %610 = vmatpush1.xpose.msra.mxu0 0.0
        %611 = vmatprep.subr.mxu0 0.0
        %612 = vmatpush1.xpose.msra.mxu0 0.0
        %613 = vmatprep.subr.mxu0 0.0
        %614 = vmatpush1.xpose.msra.mxu0 0.0
        %615 = vmatprep.subr.mxu0 0.0
        %616 = vmatpush1.xpose.msra.mxu0 0.0
        %617 = vmatprep.subr.mxu0 0.0
        %618 = vmatpush1.xpose.msra.mxu0 0.0
        %619 = vmatprep.subr.mxu0 0.0
        %620 = vmatpush1.xpose.msra.mxu0 0.0
        %621 = vmatprep.subr.mxu0 0.0
        %622 = vmatpush1.xpose.msra.mxu0 0.0
        %623 = vmatprep.subr.mxu0 0.0
        %624 = vmatpush1.xpose.msra.mxu0 0.0
        %625 = vmatprep.subr.mxu0 0.0
        %626 = vmatpush1.xpose.msra.mxu0 0.0
        %627 = vmatprep.subr.mxu0 0.0
        %628 = vmatpush1.xpose.msra.mxu0 0.0
        %629 = vmatprep.subr.mxu0 0.0
        %630 = vmatpush1.xpose.msra.mxu0 0.0
        %631 = vmatprep.subr.mxu0 0.0
        %632 = vmatpush1.xpose.msra.mxu0 0.0
        %633 = vmatprep.subr.mxu0 0.0
        %634 = vmatpush1.xpose.msra.mxu0 0.0
        %635 = vmatprep.subr.mxu0 0.0
        %636 = vmatpush1.xpose.msra.mxu0 0.0
        %637 = vmatprep.subr.mxu0 0.0
        %638 = vmatpush1.xpose.msra.mxu0 0.0
        %639 = vmatprep.subr.mxu0 0.0
        %640 = vmatpush1.xpose.msra.mxu0 0.0
        %641 = vmatprep.subr.mxu0 0.0
        %642 = vmatpush1.xpose.msra.mxu0 0.0
        %643 = vmatprep.subr.mxu0 0.0
        %644 = vmatpush1.xpose.msra.mxu0 0.0
        %645 = vmatprep.subr.mxu0 0.0
        %646 = vmatpush1.xpose.msra.mxu0 0.0
        %647 = vmatprep.subr.mxu0 0.0
        %648 = vmatpush1.xpose.msra.mxu0 0.0
        %649 = vmatprep.subr.mxu0 0.0
        %650 = vmatpush1.xpose.msra.mxu0 0.0
        %651 = vmatprep.subr.mxu0 0.0
        %652 = vmatpush1.xpose.msra.mxu0 0.0
        %653 = vmatprep.subr.mxu0 0.0
        %654 = vmatpush1.xpose.msra.mxu0 0.0
        %655 = vmatprep.subr.mxu0 0.0
        %656 = vmatpush1.xpose.msra.mxu0 0.0
        %657 = vmatprep.subr.mxu0 0.0
        %658 = vmatpush1.xpose.msra.mxu0 0.0
        %659 = vmatprep.subr.mxu0 0.0
        %660 = vmatpush1.xpose.msra.mxu0 0.0
        %661 = vmatprep.subr.mxu0 0.0
        %662 = vmatpush1.xpose.msra.mxu0 0.0
        %663 = vmatprep.subr.mxu0 0.0
        %664 = vmatpush1.xpose.msra.mxu0 0.0
        %665 = vmatprep.subr.mxu0 0.0
        %666 = vmatpush1.xpose.msra.mxu0 0.0
        %667 = vmatprep.subr.mxu0 0.0
        %668 = vmatpush1.xpose.msra.mxu0 0.0
        %669 = vmatprep.mubr.f32.mxu0 0.0
        %670 = vmatmul.mubr.f32.gmra.mrb[0].mxu0 %v597
        %v671 = vpop.f32.mrb[0].mxu0
        %v672 = vadd.f32 %v595, %v671
        %v673 = vpop.f32.mrb[0].mxu0
        %674 = vdwg.mxu0
        %vm675 = vcmask 130048
        %v676 = vsel %vm675, %v672, -inf
        %677 = vmax.xlane.f32.xlu0 %v676
        %v678 = vpop.xlane.xlu0 %677
        %v679 = vsub.f32 %v672, %v678
        %v680 = vmul.f32 %v679, 1.442695
        %v681 = vpow.pop %v680
        %v682 = vsel %vm675, %v681, 0.0
        %683 = vadd.xlane.f32.xlu0 %v682
        %v684 = vpop.xlane.xlu0 %683
        %v685 = vrcp.pop %v684
        %v686 = vmul.f32 %v684, %v685
        %v687 = vsub.f32 2.0, %v686
        %v688 = vmul.f32 %v685, %v687
        %v689 = vmul.f32 %v681, %v688
        %v691 = vsel %vm675, %v689, 0
        %693 = vmatprep.subr.mxu0 0.0
        %694 = vmatpush1.msra.mxu0 %v453
        %695 = vmatprep.subr.mxu0 0.0
        %696 = vmatpush1.msra.mxu0 %v454
        %697 = vmatprep.subr.mxu0 0.0
        %698 = vmatpush1.msra.mxu0 0.0
        %699 = vmatprep.subr.mxu0 0.0
        %700 = vmatpush1.msra.mxu0 0.0
        %701 = vmatprep.subr.mxu0 0.0
        %702 = vmatpush1.msra.mxu0 0.0
        %703 = vmatprep.subr.mxu0 0.0
        %704 = vmatpush1.msra.mxu0 0.0
        %705 = vmatprep.subr.mxu0 0.0
        %706 = vmatpush1.msra.mxu0 0.0
        %707 = vmatprep.subr.mxu0 0.0
        %708 = vmatpush1.msra.mxu0 0.0
        %709 = vmatprep.subr.mxu0 0.0
        %710 = vmatpush1.msra.mxu0 0.0
        %711 = vmatprep.subr.mxu0 0.0
        %712 = vmatpush1.msra.mxu0 0.0
        %713 = vmatprep.subr.mxu0 0.0
        %714 = vmatpush1.msra.mxu0 0.0
        %715 = vmatprep.subr.mxu0 0.0
        %716 = vmatpush1.msra.mxu0 0.0
        %717 = vmatprep.subr.mxu0 0.0
        %718 = vmatpush1.msra.mxu0 0.0
        %719 = vmatprep.subr.mxu0 0.0
        %720 = vmatpush1.msra.mxu0 0.0
        %721 = vmatprep.subr.mxu0 0.0
        %722 = vmatpush1.msra.mxu0 0.0
        %723 = vmatprep.subr.mxu0 0.0
        %724 = vmatpush1.msra.mxu0 0.0
        %725 = vmatprep.subr.mxu0 0.0
        %726 = vmatpush1.msra.mxu0 0.0
        %727 = vmatprep.subr.mxu0 0.0
        %728 = vmatpush1.msra.mxu0 0.0
        %729 = vmatprep.subr.mxu0 0.0
        %730 = vmatpush1.msra.mxu0 0.0
        %731 = vmatprep.subr.mxu0 0.0
        %732 = vmatpush1.msra.mxu0 0.0
        %733 = vmatprep.subr.mxu0 0.0
        %734 = vmatpush1.msra.mxu0 0.0
        %735 = vmatprep.subr.mxu0 0.0
        %736 = vmatpush1.msra.mxu0 0.0
        %737 = vmatprep.subr.mxu0 0.0
        %738 = vmatpush1.msra.mxu0 0.0
        %739 = vmatprep.subr.mxu0 0.0
        %740 = vmatpush1.msra.mxu0 0.0
        %741 = vmatprep.subr.mxu0 0.0
        %742 = vmatpush1.msra.mxu0 0.0
        %743 = vmatprep.subr.mxu0 0.0
        %744 = vmatpush1.msra.mxu0 0.0
        %745 = vmatprep.subr.mxu0 0.0
        %746 = vmatpush1.msra.mxu0 0.0
        %747 = vmatprep.subr.mxu0 0.0
        %748 = vmatpush1.msra.mxu0 0.0
        %749 = vmatprep.subr.mxu0 0.0
        %750 = vmatpush1.msra.mxu0 0.0
        %751 = vmatprep.subr.mxu0 0.0
        %752 = vmatpush1.msra.mxu0 0.0
        %753 = vmatprep.subr.mxu0 0.0
        %754 = vmatpush1.msra.mxu0 0.0
        %755 = vmatprep.subr.mxu0 0.0
        %756 = vmatpush1.msra.mxu0 0.0
        %757 = vmatprep.mubr.f32.mxu0 0.0
        %758 = vmatmul.mubr.f32.gmra.mrb[0].mxu0 %v691
        %v759 = vpop.f32.mrb[0].mxu0
        %v760 = vadd.f32 0.0, %v759
        %v761 = vpop.f32.mrb[0].mxu0
        %762 = vdwg.mxu0
        %763 = vst.msk [vmem:[%s443] sm:$0xff] %vm475, %v760
        %s764 = sand.u32 %s224, 1
        %s765 = scalar_lea.sflag [#allocation4], %s764
        %s766 = sand.u32 %s224, 1
        %s767 = smul.addr %s766, 8
        %s768 = scalar_lea.vmem [#allocation10], %s767
        // Predicated region
        $region61: #{tpu_custom_call.1} parent=43 // pred_check
          %p769 = pneg %p234
        $region62: #{tpu_custom_call.1} parent=43 // pred_check_branch
          %771 = sbr.rel (%p769) target = $region64
        $region63: #{tpu_custom_call.1} parent=43 // pred_region
          %s773 = ssub.s32 128, 128
          %774 = vsyncadd %s765, %s773
          %s775 = sadd.s32 %s36, %s35
          %s776 = smul.addr %s34, 4
          %s777 = sadd.s32 %s775, %s776
          %s778 = smul.addr %s777, 128
          %s779 = scalar_lea.hbm %s6, %s778
          %s781 = sshll.u32 %s768, 4
          %s782 = int_to_ptr.vmem [resolvable:$true] %s781
          %784 = dma.vmem_to_hbm [thread:$0]  %s782, 128, %s779, %s765
        $region64: #{tpu_custom_call.1} parent=43 // pred_fallthru
          _
      $region44: #{tpu_custom_call.1} parent=5 // pred_fallthru
        _
      %p785 = scmp.le.s32.totalorder 2, %s24
      // Predicated region
      $region65: #{tpu_custom_call.1} parent=5 // pred_check
        %p786 = pneg %p785
      $region66: #{tpu_custom_call.1} parent=5 // pred_check_branch
        %788 = sbr.rel (%p786) target = $region68
      $region67: #{tpu_custom_call.1} parent=5 // pred_region
        %s789 = ssub.s32 %s24, 2
        // Predicated region
        $region69: #{tpu_custom_call.1} parent=67 // pred_check
          %p790 = pneg %p240
        $region70: #{tpu_custom_call.1} parent=67 // pred_check_branch
          %792 = sbr.rel (%p790) target = $region72
        $region71: #{tpu_custom_call.1} parent=67 // pred_region
          %s793 = sand.u32 %s225, 1
          %s794 = scalar_lea.sflag [#allocation4], %s793
          %s795 = sand.u32 %s225, 1
          %s796 = smul.addr %s795, 8
          %s797 = scalar_lea.vmem [#allocation10], %s796
          %798 = dma.done %s794, 128
        $region72: #{tpu_custom_call.1} parent=67 // pred_fallthru
          _
      $region68: #{tpu_custom_call.1} parent=5 // pred_fallthru
        _
    $region6: #{tpu_custom_call.1} parent=1 // loop_footer
      %s28 = sadd.s32 1, %s24
    $region7: #{tpu_custom_call.1} parent=1 // loop_footer_branch
      %23 = sbr.rel target = $region3
    $region8: #{tpu_custom_call.1} parent=1 // loop_exit
      _
    %799 = vsyncpa [#allocation3], 1
    %s800 = scalar_lea.sflag [#allocation3], 1
    %801 = vsyncpa %s800, 1
    %802 = vsyncpa [#allocation6], 1
    %s803 = scalar_lea.sflag [#allocation6], 1
    %804 = vsyncpa %s803, 1
    %805 = vsyncpa [#allocation9], 1
    %s806 = scalar_lea.sflag [#allocation9], 1
    %807 = vsyncpa %s806, 1
    %808 = vsyncpa [#allocation4], 1
    %s809 = scalar_lea.sflag [#allocation4], 1
    %810 = vsyncpa %s809, 1

</llo_original>
